<compile_context>
chip_gen: v7x
topology: tpu7x:2x2x1
jax: 0.10.0
libtpu: 0.0.40
codegen_flags: <defaults>
</compile_context>

<pallas_src>
import jax
import jax.numpy as jnp
from jax.experimental import pallas as pl
from jax.experimental.pallas import tpu as pltpu

DIM_IN = 320        # model_dict['lenet'] -> 320 (encoder output features)
DIM_PAD = 384       # 320 lane-padded up to a multiple of 128
NUM_CLASSES = 10
CLS_PAD = 128       # lane-dense classification slab width
FEAT_DIM = 128


def supcon_kernel(x_ref, wf_ref, bf_ref, w2_ref, b2_ref, y_ref, z_ref):
    x = x_ref[...]                                        # [TB, 384] bf16

    # Fused matmul: [w1 | wc]  -> [TB, 384 + 128] f32 accumulation.
    hw = jnp.dot(x, wf_ref[...], preferred_element_type=jnp.float32) + bf_ref[...]

    # Classification head (lane-dense slab; classes live in lanes 0..9).
    y_ref[...] = hw[:, DIM_PAD:].astype(y_ref.dtype)      # [TB, 128]

    # Projection head: CELU(alpha=1) in select form (exp stays on the EUP).
    h = hw[:, :DIM_PAD]                                   # [TB, 384] f32
    h = jnp.where(h > 0.0, h, jnp.exp(jnp.minimum(h, 0.0)) - 1.0)

    z = jnp.dot(h.astype(w2_ref.dtype), w2_ref[...],
                preferred_element_type=jnp.float32) + b2_ref[...]   # [TB, 128] f32

    # F.normalize(z, dim=1): z * rsqrt(max(sum(z^2), 1e-24))  (EUP rsqrt, no divide)
    sumsq = jnp.sum(z * z, axis=1, keepdims=True)
    z_ref[...] = (z * jax.lax.rsqrt(jnp.maximum(sumsq, 1e-24))).astype(z_ref.dtype)


def pack_params(params, dtype=jnp.bfloat16):
    """Pad/fuse the nn.Linear weights once (can be done offline / outside jit).

    params: (wc [320,10], bc [1,10], w1 [320,320], b1 [1,320], w2 [320,128], b2 [1,128])
    Returns (w_fused [384,512] dtype, b_fused [1,512] f32, w2p [384,128] dtype, b2 [1,128] f32).
    """
    wc, bc, w1, b1, w2, b2 = params
    w1p = jnp.zeros((DIM_PAD, DIM_PAD), jnp.float32).at[:DIM_IN, :DIM_IN].set(w1)
    wcp = jnp.zeros((DIM_PAD, CLS_PAD), jnp.float32).at[:DIM_IN, :NUM_CLASSES].set(wc)
    w_fused = jnp.concatenate([w1p, wcp], axis=1).astype(dtype)       # [384, 512]

    b1p = jnp.zeros((1, DIM_PAD), jnp.float32).at[:, :DIM_IN].set(b1)
    bcp = jnp.zeros((1, CLS_PAD), jnp.float32).at[:, :NUM_CLASSES].set(bc)
    b_fused = jnp.concatenate([b1p, bcp], axis=1)                      # [1, 512] f32

    w2p = jnp.zeros((DIM_PAD, FEAT_DIM), jnp.float32).at[:DIM_IN, :].set(w2).astype(dtype)
    return (w_fused, b_fused, w2p, b2.astype(jnp.float32))


def supcon_lenet_forward(x, packed, *, tb=1024, dtype=jnp.bfloat16):
    """x: [B, 320] features. Returns [y [B,10], z [B,128]] (z rows unit-norm)."""
    w_fused, b_fused, w2p, b2 = packed
    B = x.shape[0]
    TB = min(tb, B)
    n_blocks = pl.cdiv(B, TB)
    B_pad = n_blocks * TB

    # Zero-pad batch (to a multiple of TB) and feature dim (320 -> 384) in one shot.
    xp = jnp.zeros((B_pad, DIM_PAD), dtype).at[:B, :DIM_IN].set(x.astype(dtype))

    NW = DIM_PAD + CLS_PAD
    y_pad, z = pl.pallas_call(
        supcon_kernel,
        out_shape=(jax.ShapeDtypeStruct((B_pad, CLS_PAD), jnp.float32),
                   jax.ShapeDtypeStruct((B_pad, FEAT_DIM), jnp.float32)),
        grid=(n_blocks,),
        in_specs=[
            pl.BlockSpec((TB, DIM_PAD), lambda i: (i, 0)),      # x tile
            pl.BlockSpec((DIM_PAD, NW), lambda i: (0, 0)),      # fused weights (resident)
            pl.BlockSpec((1, NW), lambda i: (0, 0)),            # fused bias (resident)
            pl.BlockSpec((DIM_PAD, FEAT_DIM), lambda i: (0, 0)),  # w2 (resident)
            pl.BlockSpec((1, FEAT_DIM), lambda i: (0, 0)),      # b2 (resident)
        ],
        out_specs=(pl.BlockSpec((TB, CLS_PAD), lambda i: (i, 0)),
                   pl.BlockSpec((TB, FEAT_DIM), lambda i: (i, 0))),
        compiler_params=pltpu.CompilerParams(
            dimension_semantics=("parallel",),
            vmem_limit_bytes=32 * 1024 * 1024),
    )(xp, w_fused, b_fused, w2p, b2)

    return [y_pad[:B, :NUM_CLASSES], z[:B]]


def init_params(key):
    """Deterministic nn.Linear-style init (uniform(-1/sqrt(fan_in), 1/sqrt(fan_in))).
    Weights are stored already transposed: [in, out]."""
    def linear(key, fan_in, fan_out):
        kw, kb = jax.random.split(key)
        bound = 1.0 / jnp.sqrt(fan_in)
        w = jax.random.uniform(kw, (fan_in, fan_out), jnp.float32, -bound, bound)
        b = jax.random.uniform(kb, (1, fan_out), jnp.float32, -bound, bound)
        return w, b

    k1, k2, k3 = jax.random.split(key, 3)
    wc, bc = linear(k1, DIM_IN, NUM_CLASSES)   # self.cls
    w1, b1 = linear(k2, DIM_IN, DIM_IN)        # self.scl[0]
    w2, b2 = linear(k3, DIM_IN, FEAT_DIM)      # self.scl[2]
    return (wc, bc, w1, b1, w2, b2)


def _reference_forward(x, params):
    """Pure-JAX f32 reference matching the PyTorch module."""
    wc, bc, w1, b1, w2, b2 = params
    y = x @ wc + bc
    h = x @ w1 + b1
    h = jnp.where(h > 0.0, h, jnp.exp(jnp.minimum(h, 0.0)) - 1.0)   # CELU(alpha=1)
    z = h @ w2 + b2
    z = z / jnp.maximum(jnp.linalg.norm(z, axis=1, keepdims=True), 1e-12)
    return y, z


if __name__ == "__main__":
    key = jax.random.PRNGKey(0)
    kx, kp = jax.random.split(key)
    B = 2
    x = jax.random.normal(kx, (B, DIM_IN), jnp.float32)
    params = init_params(kp)
    packed = pack_params(params)             # one-time weight fuse/pad

    y, z = supcon_lenet_forward(x, packed)
    jax.block_until_ready((y, z))

    assert y.shape == (B, NUM_CLASSES)
    assert z.shape == (B, FEAT_DIM)
    # z rows should be unit-norm (normalization done in f32 inside the kernel).
    assert jnp.allclose(jnp.linalg.norm(z, axis=1), 1.0, atol=1e-4)
    # Loose check against the f32 reference (kernel matmuls run in bf16).
    y_ref, z_ref = _reference_forward(x, params)
    assert jnp.allclose(y, y_ref, atol=0.1)
    assert jnp.allclose(z, z_ref, atol=0.1)
    print("KERNEL_OK")
</pallas_src>

<mosaic_0001>
module attributes {stable_mosaic.version = 11 : i64} {
  func.func @supcon_kernel(%arg0: i32, %arg1: memref<2x384xbf16, #tpu.memory_space<vmem>>, %arg2: memref<384x512xbf16, #tpu.memory_space<vmem>>, %arg3: memref<1x512xf32, #tpu.memory_space<vmem>>, %arg4: memref<384x128xbf16, #tpu.memory_space<vmem>>, %arg5: memref<1x128xf32, #tpu.memory_space<vmem>>, %arg6: memref<2x128xf32, #tpu.memory_space<vmem>>, %arg7: memref<2x128xf32, #tpu.memory_space<vmem>>) attributes {dimension_semantics = [#tpu.dimension_semantics<parallel>], iteration_bounds = array<i64: 1>, scalar_prefetch = 0 : i64, scratch_operands = 0 : i64, tpu.core_type = #tpu.core_type<tc>, window_params = [{transform_indices = @transform_0, window_bounds = array<i64: 2, 384>}, {pipeline_mode = #tpu.pipeline_mode<synchronous>, transform_indices = @transform_1, window_bounds = array<i64: 384, 512>}, {pipeline_mode = #tpu.pipeline_mode<synchronous>, transform_indices = @transform_2, window_bounds = array<i64: 1, 512>}, {pipeline_mode = #tpu.pipeline_mode<synchronous>, transform_indices = @transform_3, window_bounds = array<i64: 384, 128>}, {pipeline_mode = #tpu.pipeline_mode<synchronous>, transform_indices = @transform_4, window_bounds = array<i64: 1, 128>}, {transform_indices = @transform_5, window_bounds = array<i64: 2, 128>}, {transform_indices = @transform_6, window_bounds = array<i64: 2, 128>}]} {
    %c0 = arith.constant 0 : index
    %c0_0 = arith.constant 0 : index
    %0 = vector.load %arg1[%c0, %c0_0] : memref<2x384xbf16, #tpu.memory_space<vmem>>, vector<2x384xbf16>
    %c0_1 = arith.constant 0 : index
    %c0_2 = arith.constant 0 : index
    %1 = vector.load %arg2[%c0_1, %c0_2] : memref<384x512xbf16, #tpu.memory_space<vmem>>, vector<384x512xbf16>
    %cst = arith.constant dense<0.000000e+00> : vector<2x512xf32>
    %2 = tpu.matmul %0, %1, %cst {dimension_numbers = #tpu.dot_dimension_numbers<[1], [0], [0], [1], [0, 0, 1, 1], [], []>} : vector<2x384xbf16>, vector<384x512xbf16>, vector<2x512xf32> -> vector<2x512xf32>
    %c0_3 = arith.constant 0 : index
    %c0_4 = arith.constant 0 : index
    %3 = vector.load %arg3[%c0_3, %c0_4] : memref<1x512xf32, #tpu.memory_space<vmem>>, vector<1x512xf32>
    %4 = vector.broadcast %3 : vector<1x512xf32> to vector<2x512xf32>
    %5 = arith.addf %2, %4 : vector<2x512xf32>
    %6 = vector.extract_strided_slice %5 {offsets = [0, 384], sizes = [2, 128], strides = [1, 1]} : vector<2x512xf32> to vector<2x128xf32>
    %c0_5 = arith.constant 0 : index
    %c0_6 = arith.constant 0 : index
    %7 = vector.load %arg6[%c0_5, %c0_6] : memref<2x128xf32, #tpu.memory_space<vmem>>, vector<2x128xf32>
    tpu.vector_store %arg6[%c0_5, %c0_6], %6 {strides = array<i32>} : memref<2x128xf32, #tpu.memory_space<vmem>>, vector<2x128xf32>,
    %8 = vector.extract_strided_slice %5 {offsets = [0, 0], sizes = [2, 384], strides = [1, 1]} : vector<2x512xf32> to vector<2x384xf32>
    %cst_7 = arith.constant 0.000000e+00 : f32
    %9 = vector.broadcast %cst_7 : f32 to vector<2x384xf32>
    %10 = arith.cmpf ogt, %8, %9 : vector<2x384xf32>
    %cst_8 = arith.constant 0.000000e+00 : f32
    %11 = vector.broadcast %cst_8 : f32 to vector<2x384xf32>
    %12 = arith.minimumf %8, %11 : vector<2x384xf32>
    %13 = math.exp %12 : vector<2x384xf32>
    %cst_9 = arith.constant 1.000000e+00 : f32
    %14 = vector.broadcast %cst_9 : f32 to vector<2x384xf32>
    %15 = arith.subf %13, %14 : vector<2x384xf32>
    %16 = arith.select %10, %8, %15 : vector<2x384xi1>, vector<2x384xf32>
    %17 = arith.truncf %16 : vector<2x384xf32> to vector<2x384xbf16>
    %c0_10 = arith.constant 0 : index
    %c0_11 = arith.constant 0 : index
    %18 = vector.load %arg4[%c0_10, %c0_11] : memref<384x128xbf16, #tpu.memory_space<vmem>>, vector<384x128xbf16>
    %cst_12 = arith.constant dense<0.000000e+00> : vector<2x128xf32>
    %19 = tpu.matmul %17, %18, %cst_12 {dimension_numbers = #tpu.dot_dimension_numbers<[1], [0], [0], [1], [0, 0, 1, 1], [], []>} : vector<2x384xbf16>, vector<384x128xbf16>, vector<2x128xf32> -> vector<2x128xf32>
    %c0_13 = arith.constant 0 : index
    %c0_14 = arith.constant 0 : index
    %20 = vector.load %arg5[%c0_13, %c0_14] : memref<1x128xf32, #tpu.memory_space<vmem>>, vector<1x128xf32>
    %21 = vector.broadcast %20 : vector<1x128xf32> to vector<2x128xf32>
    %22 = arith.addf %19, %21 : vector<2x128xf32>
    %23 = arith.mulf %22, %22 : vector<2x128xf32>
    %cst_15 = arith.constant dense<0.000000e+00> : vector<2xf32>
    %24 = vector.multi_reduction <add>, %23, %cst_15 [1] : vector<2x128xf32> to vector<2xf32>
    %25 = vector.shape_cast %24 : vector<2xf32> to vector<2x1xf32>
    %cst_16 = arith.constant 1.000000e-24 : f32
    %26 = vector.broadcast %cst_16 : f32 to vector<2x1xf32>
    %27 = arith.maximumf %25, %26 : vector<2x1xf32>
    %28 = math.rsqrt %27 : vector<2x1xf32>
    %29 = vector.broadcast %28 : vector<2x1xf32> to vector<2x128xf32>
    %30 = arith.mulf %22, %29 : vector<2x128xf32>
    %c0_17 = arith.constant 0 : index
    %c0_18 = arith.constant 0 : index
    %31 = vector.load %arg7[%c0_17, %c0_18] : memref<2x128xf32, #tpu.memory_space<vmem>>, vector<2x128xf32>
    tpu.vector_store %arg7[%c0_17, %c0_18], %30 {strides = array<i32>} : memref<2x128xf32, #tpu.memory_space<vmem>>, vector<2x128xf32>,
    return
  }
  func.func @transform_0(%arg0: i32) -> (i32, i32) {
    %c0_i32 = arith.constant 0 : i32
    %c0_i32_0 = arith.constant 0 : i32
    return %arg0, %c0_i32 : i32, i32
  }
  func.func @transform_1(%arg0: i32) -> (i32, i32) {
    %c0_i32 = arith.constant 0 : i32
    %c0_i32_0 = arith.constant 0 : i32
    %c0_i32_1 = arith.constant 0 : i32
    return %c0_i32, %c0_i32_0 : i32, i32
  }
  func.func @transform_2(%arg0: i32) -> (i32, i32) {
    %c0_i32 = arith.constant 0 : i32
    %c0_i32_0 = arith.constant 0 : i32
    %c0_i32_1 = arith.constant 0 : i32
    return %c0_i32, %c0_i32_0 : i32, i32
  }
  func.func @transform_3(%arg0: i32) -> (i32, i32) {
    %c0_i32 = arith.constant 0 : i32
    %c0_i32_0 = arith.constant 0 : i32
    %c0_i32_1 = arith.constant 0 : i32
    return %c0_i32, %c0_i32_0 : i32, i32
  }
  func.func @transform_4(%arg0: i32) -> (i32, i32) {
    %c0_i32 = arith.constant 0 : i32
    %c0_i32_0 = arith.constant 0 : i32
    %c0_i32_1 = arith.constant 0 : i32
    return %c0_i32, %c0_i32_0 : i32, i32
  }
  func.func @transform_5(%arg0: i32) -> (i32, i32) {
    %c0_i32 = arith.constant 0 : i32
    %c0_i32_0 = arith.constant 0 : i32
    return %arg0, %c0_i32 : i32, i32
  }
  func.func @transform_6(%arg0: i32) -> (i32, i32) {
    %c0_i32 = arith.constant 0 : i32
    %c0_i32_0 = arith.constant 0 : i32
    return %arg0, %c0_i32 : i32, i32
  }
}

</mosaic_0001>

<llo_original>
// kernel: tpu_custom_call.1
$region0: #{tpu_custom_call.1}
  #allocation0 [shape = 'u32[]', space=smem, size = 0x4, offset = 0x4, fixed_abs, tag = 'smem constant byte address 0x4 - core index']
  #allocation1 [shape = 'u32[144,128]{1,0:T(1,128)}', space=vmem, size = 0x12000, scoped, tag = 'internal scratch']
  %s0 = inlined_call_operand.hbm [shape: bf16[2,384], index: 0, kind: input, shape index: {}]
  %s1 = inlined_call_operand.hbm [shape: bf16[384,512], index: 1, kind: input, shape index: {}]
  %s2 = inlined_call_operand.vmem [shape: f32[1,512], index: 2, kind: input, shape index: {}]
  %s3 = inlined_call_operand.hbm [shape: bf16[384,128], index: 3, kind: input, shape index: {}]
  %s4 = inlined_call_operand.vmem [shape: f32[1,128], index: 4, kind: input, shape index: {}]
  %s5 = inlined_call_operand.hbm [shape: f32[2,128], index: 5, kind: output, shape index: {0}]
  %s6 = inlined_call_operand.hbm [shape: f32[2,128], index: 6, kind: output, shape index: {1}]
  %7 = xla_tuple %s5, %s6
  %s8 = sld [smem:[#allocation0]]
  $region50: #{tpu_custom_call.1} parent=0
    _
  %s10 = ssub.s32 1, %s8
  %s11 = scalar_select 0, %s10, %s8
  $region1: #{tpu_custom_call.1} parent=0
    #allocation2 [shape = 'u8[1536]{0}', space=vmem, size = 0x800, scoped, tag = 'input window, operand 0, single buffered']
    #allocation3 [shape = 's32[1]{0}', space=sflag, size = 0x4, scoped, tag = 'scoped memory for tpu_custom_call.1']
    #allocation4 [shape = 's32[1]{0}', space=sflag, size = 0x4, scoped, tag = 'scoped memory for tpu_custom_call.1']
    #allocation5 [shape = 'u8[393216]{0}', space=vmem, size = 0x60000, scoped, tag = 'input window, operand 1, single buffered']
    #allocation6 [shape = 's32[1]{0}', space=sflag, size = 0x4, scoped, tag = 'scoped memory for tpu_custom_call.1']
    #allocation7 [shape = 'u8[98304]{0}', space=vmem, size = 0x18000, scoped, tag = 'input window, operand 3, single buffered']
    #allocation8 [shape = 'u8[1024]{0}', space=vmem, size = 0x400, scoped, tag = 'output window, operand 0, single buffered']
    #allocation9 [shape = 'u8[1024]{0}', space=vmem, size = 0x400, scoped, tag = 'output window, operand 1, single buffered']
    #allocation10 [shape = 's32[1]{0}', space=sflag, size = 0x4, scoped, tag = 'scoped memory for tpu_custom_call.1']
    %12 = vsyncpa [#allocation3], 0
    %13 = vsyncpa [#allocation6], 0
    %14 = vsyncpa [#allocation4], 0
    %15 = vsyncpa [#allocation10], 0
    // Predicated region
    $region2: #{tpu_custom_call.1} parent=1 // pred_check
      _
    $region3: #{tpu_custom_call.1} parent=1 // pred_check_branch
      %17 = sbr.rel (0) target = $region5
    $region4: #{tpu_custom_call.1} parent=1 // pred_region
      %s19 = ssub.s32 48, 48
      %20 = vsyncadd [#allocation3], %s19
      %s22 = sshll.u32 [#allocation2], 4
      %s23 = int_to_ptr.vmem [resolvable:$true] %s22
      %25 = dma.hbm_to_vmem [thread:$0]  %s0, 48, %s23, [#allocation3]
    $region5: #{tpu_custom_call.1} parent=1 // pred_fallthru
      _
    // Predicated region
    $region6: #{tpu_custom_call.1} parent=1 // pred_check
      _
    $region7: #{tpu_custom_call.1} parent=1 // pred_check_branch
      %27 = sbr.rel (0) target = $region9
    $region8: #{tpu_custom_call.1} parent=1 // pred_region
      %s29 = ssub.s32 12288, 12288
      %30 = vsyncadd [#allocation6], %s29
      %s31 = sshll.u32 [#allocation5], 4
      %s32 = int_to_ptr.vmem [resolvable:$true] %s31
      %37 = dma.hbm_to_vmem [thread:$0]  %s1, 12288, %s32, [#allocation6], 256, 256, 16
    $region9: #{tpu_custom_call.1} parent=1 // pred_fallthru
      _
    // Predicated region
    $region10: #{tpu_custom_call.1} parent=1 // pred_check
      _
    $region11: #{tpu_custom_call.1} parent=1 // pred_check_branch
      %39 = sbr.rel (0) target = $region13
    $region12: #{tpu_custom_call.1} parent=1 // pred_region
      _
    $region13: #{tpu_custom_call.1} parent=1 // pred_fallthru
      _
    // Predicated region
    $region14: #{tpu_custom_call.1} parent=1 // pred_check
      _
    $region15: #{tpu_custom_call.1} parent=1 // pred_check_branch
      %41 = sbr.rel (0) target = $region17
    $region16: #{tpu_custom_call.1} parent=1 // pred_region
      %s43 = ssub.s32 3072, 3072
      %44 = vsyncadd [#allocation6], %s43
      %s45 = sshll.u32 [#allocation7], 4
      %s46 = int_to_ptr.vmem [resolvable:$true] %s45
      %51 = dma.hbm_to_vmem [thread:$0]  %s3, 3072, %s46, [#allocation6], 64, 64, 4
    $region17: #{tpu_custom_call.1} parent=1 // pred_fallthru
      _
    // Predicated region
    $region18: #{tpu_custom_call.1} parent=1 // pred_check
      _
    $region19: #{tpu_custom_call.1} parent=1 // pred_check_branch
      %53 = sbr.rel (0) target = $region21
    $region20: #{tpu_custom_call.1} parent=1 // pred_region
      _
    $region21: #{tpu_custom_call.1} parent=1 // pred_fallthru
      _
    // Predicated region
    $region22: #{tpu_custom_call.1} parent=1 // pred_check
      _
    $region23: #{tpu_custom_call.1} parent=1 // pred_check_branch
      %55 = sbr.rel (0) target = $region25
    $region24: #{tpu_custom_call.1} parent=1 // pred_region
      %56 = dma.done [#allocation3], 48
    $region25: #{tpu_custom_call.1} parent=1 // pred_fallthru
      _
    // Predicated region
    $region26: #{tpu_custom_call.1} parent=1 // pred_check
      _
    $region27: #{tpu_custom_call.1} parent=1 // pred_check_branch
      %58 = sbr.rel (0) target = $region29
    $region28: #{tpu_custom_call.1} parent=1 // pred_region
      %59 = dma.done [#allocation6], 12288
    $region29: #{tpu_custom_call.1} parent=1 // pred_fallthru
      _
    // Predicated region
    $region30: #{tpu_custom_call.1} parent=1 // pred_check
      _
    $region31: #{tpu_custom_call.1} parent=1 // pred_check_branch
      %61 = sbr.rel (0) target = $region33
    $region32: #{tpu_custom_call.1} parent=1 // pred_region
      %62 = dma.done [#allocation6], 3072
    $region33: #{tpu_custom_call.1} parent=1 // pred_fallthru
      _
    %v64 = vld [vmem:[#allocation2] sm:$0x7]
    %v65 = vld [vmem:[#allocation5] sm:$0xff]
    %v66 = vld [vmem:[#allocation5 + $0x8] sm:$0xff]
    %v67 = vld [vmem:[#allocation5 + $0x10] sm:$0xff]
    %v68 = vld [vmem:[#allocation5 + $0x18] sm:$0xff]
    %v69 = vld [vmem:[#allocation5 + $0x20] sm:$0xff]
    %v70 = vld [vmem:[#allocation5 + $0x28] sm:$0xff]
    %v71 = vld [vmem:[#allocation5 + $0x30] sm:$0xff]
    %v72 = vld [vmem:[#allocation5 + $0x38] sm:$0xff]
    %v73 = vld [vmem:[#allocation5 + $0x40] sm:$0xff]
    %v74 = vld [vmem:[#allocation5 + $0x48] sm:$0xff]
    %v75 = vld [vmem:[#allocation5 + $0x50] sm:$0xff]
    %v76 = vld [vmem:[#allocation5 + $0x58] sm:$0xff]
    %v77 = vld [vmem:[#allocation5 + $0x60] sm:$0xff]
    %v78 = vld [vmem:[#allocation5 + $0x68] sm:$0xff]
    %v79 = vld [vmem:[#allocation5 + $0x70] sm:$0xff]
    %v80 = vld [vmem:[#allocation5 + $0x78] sm:$0xff]
    %v81 = vld [vmem:[#allocation5 + $0x80] sm:$0xff]
    %v82 = vld [vmem:[#allocation5 + $0x88] sm:$0xff]
    %v83 = vld [vmem:[#allocation5 + $0x90] sm:$0xff]
    %v84 = vld [vmem:[#allocation5 + $0x98] sm:$0xff]
    %v85 = vld [vmem:[#allocation5 + $0xa0] sm:$0xff]
    %v86 = vld [vmem:[#allocation5 + $0xa8] sm:$0xff]
    %v87 = vld [vmem:[#allocation5 + $0xb0] sm:$0xff]
    %v88 = vld [vmem:[#allocation5 + $0xb8] sm:$0xff]
    %v89 = vld [vmem:[#allocation5 + $0xc0] sm:$0xff]
    %v90 = vld [vmem:[#allocation5 + $0xc8] sm:$0xff]
    %v91 = vld [vmem:[#allocation5 + $0xd0] sm:$0xff]
    %v92 = vld [vmem:[#allocation5 + $0xd8] sm:$0xff]
    %v93 = vld [vmem:[#allocation5 + $0xe0] sm:$0xff]
    %v94 = vld [vmem:[#allocation5 + $0xe8] sm:$0xff]
    %v95 = vld [vmem:[#allocation5 + $0xf0] sm:$0xff]
    %v96 = vld [vmem:[#allocation5 + $0xf8] sm:$0xff]
    %v97 = vld [vmem:[#allocation5 + $0x100] sm:$0xff]
    %v98 = vld [vmem:[#allocation5 + $0x108] sm:$0xff]
    %v99 = vld [vmem:[#allocation5 + $0x110] sm:$0xff]
    %v100 = vld [vmem:[#allocation5 + $0x118] sm:$0xff]
    %v101 = vld [vmem:[#allocation5 + $0x120] sm:$0xff]
    %v102 = vld [vmem:[#allocation5 + $0x128] sm:$0xff]
    %v103 = vld [vmem:[#allocation5 + $0x130] sm:$0xff]
    %v104 = vld [vmem:[#allocation5 + $0x138] sm:$0xff]
    %v105 = vld [vmem:[#allocation5 + $0x140] sm:$0xff]
    %v106 = vld [vmem:[#allocation5 + $0x148] sm:$0xff]
    %v107 = vld [vmem:[#allocation5 + $0x150] sm:$0xff]
    %v108 = vld [vmem:[#allocation5 + $0x158] sm:$0xff]
    %v109 = vld [vmem:[#allocation5 + $0x160] sm:$0xff]
    %v110 = vld [vmem:[#allocation5 + $0x168] sm:$0xff]
    %v111 = vld [vmem:[#allocation5 + $0x170] sm:$0xff]
    %v112 = vld [vmem:[#allocation5 + $0x178] sm:$0xff]
    %v113 = vld [vmem:[#allocation5 + $0x180] sm:$0xff]
    %v114 = vld [vmem:[#allocation5 + $0x188] sm:$0xff]
    %v115 = vld [vmem:[#allocation5 + $0x190] sm:$0xff]
    %v116 = vld [vmem:[#allocation5 + $0x198] sm:$0xff]
    %v117 = vld [vmem:[#allocation5 + $0x1a0] sm:$0xff]
    %v118 = vld [vmem:[#allocation5 + $0x1a8] sm:$0xff]
    %v119 = vld [vmem:[#allocation5 + $0x1b0] sm:$0xff]
    %v120 = vld [vmem:[#allocation5 + $0x1b8] sm:$0xff]
    %v121 = vld [vmem:[#allocation5 + $0x1c0] sm:$0xff]
    %v122 = vld [vmem:[#allocation5 + $0x1c8] sm:$0xff]
    %v123 = vld [vmem:[#allocation5 + $0x1d0] sm:$0xff]
    %v124 = vld [vmem:[#allocation5 + $0x1d8] sm:$0xff]
    %v125 = vld [vmem:[#allocation5 + $0x1e0] sm:$0xff]
    %v126 = vld [vmem:[#allocation5 + $0x1e8] sm:$0xff]
    %v127 = vld [vmem:[#allocation5 + $0x1f0] sm:$0xff]
    %v128 = vld [vmem:[#allocation5 + $0x1f8] sm:$0xff]
    %v129 = vld [vmem:[#allocation5 + $0x200] sm:$0xff]
    %v130 = vld [vmem:[#allocation5 + $0x208] sm:$0xff]
    %v131 = vld [vmem:[#allocation5 + $0x210] sm:$0xff]
    %v132 = vld [vmem:[#allocation5 + $0x218] sm:$0xff]
    %v133 = vld [vmem:[#allocation5 + $0x220] sm:$0xff]
    %v134 = vld [vmem:[#allocation5 + $0x228] sm:$0xff]
    %v135 = vld [vmem:[#allocation5 + $0x230] sm:$0xff]
    %v136 = vld [vmem:[#allocation5 + $0x238] sm:$0xff]
    %v137 = vld [vmem:[#allocation5 + $0x240] sm:$0xff]
    %v138 = vld [vmem:[#allocation5 + $0x248] sm:$0xff]
    %v139 = vld [vmem:[#allocation5 + $0x250] sm:$0xff]
    %v140 = vld [vmem:[#allocation5 + $0x258] sm:$0xff]
    %v141 = vld [vmem:[#allocation5 + $0x260] sm:$0xff]
    %v142 = vld [vmem:[#allocation5 + $0x268] sm:$0xff]
    %v143 = vld [vmem:[#allocation5 + $0x270] sm:$0xff]
    %v144 = vld [vmem:[#allocation5 + $0x278] sm:$0xff]
    %v145 = vld [vmem:[#allocation5 + $0x280] sm:$0xff]
    %v146 = vld [vmem:[#allocation5 + $0x288] sm:$0xff]
    %v147 = vld [vmem:[#allocation5 + $0x290] sm:$0xff]
    %v148 = vld [vmem:[#allocation5 + $0x298] sm:$0xff]
    %v149 = vld [vmem:[#allocation5 + $0x2a0] sm:$0xff]
    %v150 = vld [vmem:[#allocation5 + $0x2a8] sm:$0xff]
    %v151 = vld [vmem:[#allocation5 + $0x2b0] sm:$0xff]
    %v152 = vld [vmem:[#allocation5 + $0x2b8] sm:$0xff]
    %v153 = vld [vmem:[#allocation5 + $0x2c0] sm:$0xff]
    %v154 = vld [vmem:[#allocation5 + $0x2c8] sm:$0xff]
    %v155 = vld [vmem:[#allocation5 + $0x2d0] sm:$0xff]
    %v156 = vld [vmem:[#allocation5 + $0x2d8] sm:$0xff]
    %v157 = vld [vmem:[#allocation5 + $0x2e0] sm:$0xff]
    %v158 = vld [vmem:[#allocation5 + $0x2e8] sm:$0xff]
    %v159 = vld [vmem:[#allocation5 + $0x2f0] sm:$0xff]
    %v160 = vld [vmem:[#allocation5 + $0x2f8] sm:$0xff]
    %v161 = vld [vmem:[%s2] sm:$0xf]
    %v163 = vlaneseq
    %v164 = vshrl.u32 %v163, 7
    %v165 = vsub.s32 0, %v164
    %v166 = vrot.slane %v161, %v165
    %v167 = vlaneseq
    %v168 = vshrl.u32 %v167, 7
    %v169 = vsub.s32 1, %v168
    %v170 = vrot.slane %v161, %v169
    %v171 = vlaneseq
    %v172 = vshrl.u32 %v171, 7
    %v173 = vsub.s32 2, %v172
    %v174 = vrot.slane %v161, %v173
    %v175 = vlaneseq
    %v176 = vshrl.u32 %v175, 7
    %v177 = vsub.s32 3, %v176
    %v178 = vrot.slane %v161, %v177
    %v185 = vunpack.c.l.s4 1966171168
    %v186 = vunpack.c.0.s8 %v185
    %v187 = vlaneseq
    %v188 = vshrl.u32 %v187, 7
    %v189 = vsub.s32 %v186, %v188
    %v190 = vrot.slane %v64, %v189
    %v191 = vcombine.high %v190, %v190
    %v193 = vunpack.c.l.s4 1966171168
    %v194 = vunpack.c.0.s8 %v193
    %v195 = vlaneseq
    %v196 = vshrl.u32 %v195, 7
    %v197 = vsub.s32 %v194, %v196
    %v198 = vrot.slane %v190, %v197
    %v200 = vunpack.c.l.s4 1966171168
    %v201 = vunpack.c.0.s8 %v200
    %v202 = vlaneseq
    %v203 = vshrl.u32 %v202, 7
    %v204 = vsub.s32 %v201, %v203
    %v205 = vrot.slane %v191, %v204
    %v206 = vcombine.high %v198, %v198
    %v306 = vunpack.c.l.b16 %v65
    %v307 = vunpack.c.h.b16 %v65
    %v308 = vunpack.c.l.b16 %v66
    %v309 = vunpack.c.h.b16 %v66
    %v310 = vunpack.c.l.b16 %v67
    %v311 = vunpack.c.h.b16 %v67
    %v312 = vunpack.c.l.b16 %v68
    %v313 = vunpack.c.h.b16 %v68
    %v314 = vunpack.c.l.b16 %v69
    %v315 = vunpack.c.h.b16 %v69
    %v316 = vunpack.c.l.b16 %v70
    %v317 = vunpack.c.h.b16 %v70
    %v318 = vunpack.c.l.b16 %v71
    %v319 = vunpack.c.h.b16 %v71
    %v320 = vunpack.c.l.b16 %v72
    %v321 = vunpack.c.h.b16 %v72
    %v322 = vunpack.c.l.b16 %v73
    %v323 = vunpack.c.h.b16 %v73
    %v324 = vunpack.c.l.b16 %v74
    %v325 = vunpack.c.h.b16 %v74
    %v326 = vunpack.c.l.b16 %v75
    %v327 = vunpack.c.h.b16 %v75
    %v328 = vunpack.c.l.b16 %v76
    %v329 = vunpack.c.h.b16 %v76
    %v330 = vunpack.c.l.b16 %v77
    %v331 = vunpack.c.h.b16 %v77
    %v332 = vunpack.c.l.b16 %v78
    %v333 = vunpack.c.h.b16 %v78
    %v334 = vunpack.c.l.b16 %v79
    %v335 = vunpack.c.h.b16 %v79
    %v336 = vunpack.c.l.b16 %v80
    %v337 = vunpack.c.h.b16 %v80
    %v338 = vunpack.c.l.b16 %v81
    %v339 = vunpack.c.h.b16 %v81
    %v340 = vunpack.c.l.b16 %v82
    %v341 = vunpack.c.h.b16 %v82
    %v342 = vunpack.c.l.b16 %v83
    %v343 = vunpack.c.h.b16 %v83
    %v344 = vunpack.c.l.b16 %v84
    %v345 = vunpack.c.h.b16 %v84
    %v346 = vunpack.c.l.b16 %v85
    %v347 = vunpack.c.h.b16 %v85
    %v348 = vunpack.c.l.b16 %v86
    %v349 = vunpack.c.h.b16 %v86
    %v350 = vunpack.c.l.b16 %v87
    %v351 = vunpack.c.h.b16 %v87
    %v352 = vunpack.c.l.b16 %v88
    %v353 = vunpack.c.h.b16 %v88
    %v354 = vunpack.c.l.b16 %v89
    %v355 = vunpack.c.h.b16 %v89
    %v356 = vunpack.c.l.b16 %v90
    %v357 = vunpack.c.h.b16 %v90
    %v358 = vunpack.c.l.b16 %v91
    %v359 = vunpack.c.h.b16 %v91
    %v360 = vunpack.c.l.b16 %v92
    %v361 = vunpack.c.h.b16 %v92
    %v362 = vunpack.c.l.b16 %v93
    %v363 = vunpack.c.h.b16 %v93
    %v364 = vunpack.c.l.b16 %v94
    %v365 = vunpack.c.h.b16 %v94
    %v366 = vunpack.c.l.b16 %v95
    %v367 = vunpack.c.h.b16 %v95
    %v368 = vunpack.c.l.b16 %v96
    %v369 = vunpack.c.h.b16 %v96
    %v370 = vunpack.c.l.b16 %v97
    %v371 = vunpack.c.h.b16 %v97
    %v372 = vunpack.c.l.b16 %v98
    %v373 = vunpack.c.h.b16 %v98
    %v374 = vunpack.c.l.b16 %v99
    %v375 = vunpack.c.h.b16 %v99
    %v376 = vunpack.c.l.b16 %v100
    %v377 = vunpack.c.h.b16 %v100
    %v378 = vunpack.c.l.b16 %v101
    %v379 = vunpack.c.h.b16 %v101
    %v380 = vunpack.c.l.b16 %v102
    %v381 = vunpack.c.h.b16 %v102
    %v382 = vunpack.c.l.b16 %v103
    %v383 = vunpack.c.h.b16 %v103
    %v384 = vunpack.c.l.b16 %v104
    %v385 = vunpack.c.h.b16 %v104
    %v386 = vunpack.c.l.b16 %v105
    %v387 = vunpack.c.h.b16 %v105
    %v388 = vunpack.c.l.b16 %v106
    %v389 = vunpack.c.h.b16 %v106
    %v390 = vunpack.c.l.b16 %v107
    %v391 = vunpack.c.h.b16 %v107
    %v392 = vunpack.c.l.b16 %v108
    %v393 = vunpack.c.h.b16 %v108
    %v394 = vunpack.c.l.b16 %v109
    %v395 = vunpack.c.h.b16 %v109
    %v396 = vunpack.c.l.b16 %v110
    %v397 = vunpack.c.h.b16 %v110
    %v398 = vunpack.c.l.b16 %v111
    %v399 = vunpack.c.h.b16 %v111
    %v400 = vunpack.c.l.b16 %v112
    %v401 = vunpack.c.h.b16 %v112
    %v402 = vunpack.c.l.b16 %v113
    %v403 = vunpack.c.h.b16 %v113
    %v404 = vunpack.c.l.b16 %v114
    %v405 = vunpack.c.h.b16 %v114
    %v406 = vunpack.c.l.b16 %v115
    %v407 = vunpack.c.h.b16 %v115
    %v408 = vunpack.c.l.b16 %v116
    %v409 = vunpack.c.h.b16 %v116
    %v410 = vunpack.c.l.b16 %v117
    %v411 = vunpack.c.h.b16 %v117
    %v412 = vunpack.c.l.b16 %v118
    %v413 = vunpack.c.h.b16 %v118
    %v414 = vunpack.c.l.b16 %v119
    %v415 = vunpack.c.h.b16 %v119
    %v416 = vunpack.c.l.b16 %v120
    %v417 = vunpack.c.h.b16 %v120
    %v418 = vunpack.c.l.b16 %v121
    %v419 = vunpack.c.h.b16 %v121
    %v420 = vunpack.c.l.b16 %v122
    %v421 = vunpack.c.h.b16 %v122
    %v422 = vunpack.c.l.b16 %v123
    %v423 = vunpack.c.h.b16 %v123
    %v424 = vunpack.c.l.b16 %v124
    %v425 = vunpack.c.h.b16 %v124
    %v426 = vunpack.c.l.b16 %v125
    %v427 = vunpack.c.h.b16 %v125
    %v428 = vunpack.c.l.b16 %v126
    %v429 = vunpack.c.h.b16 %v126
    %v430 = vunpack.c.l.b16 %v127
    %v431 = vunpack.c.h.b16 %v127
    %v432 = vunpack.c.l.b16 %v128
    %v433 = vunpack.c.h.b16 %v128
    %v434 = vunpack.c.l.b16 %v129
    %v435 = vunpack.c.h.b16 %v129
    %v436 = vunpack.c.l.b16 %v130
    %v437 = vunpack.c.h.b16 %v130
    %v438 = vunpack.c.l.b16 %v131
    %v439 = vunpack.c.h.b16 %v131
    %v440 = vunpack.c.l.b16 %v132
    %v441 = vunpack.c.h.b16 %v132
    %v442 = vunpack.c.l.b16 %v133
    %v443 = vunpack.c.h.b16 %v133
    %v444 = vunpack.c.l.b16 %v134
    %v445 = vunpack.c.h.b16 %v134
    %v446 = vunpack.c.l.b16 %v135
    %v447 = vunpack.c.h.b16 %v135
    %v448 = vunpack.c.l.b16 %v136
    %v449 = vunpack.c.h.b16 %v136
    %v450 = vunpack.c.l.b16 %v137
    %v451 = vunpack.c.h.b16 %v137
    %v452 = vunpack.c.l.b16 %v138
    %v453 = vunpack.c.h.b16 %v138
    %v454 = vunpack.c.l.b16 %v139
    %v455 = vunpack.c.h.b16 %v139
    %v456 = vunpack.c.l.b16 %v140
    %v457 = vunpack.c.h.b16 %v140
    %v458 = vunpack.c.l.b16 %v141
    %v459 = vunpack.c.h.b16 %v141
    %v460 = vunpack.c.l.b16 %v142
    %v461 = vunpack.c.h.b16 %v142
    %v462 = vunpack.c.l.b16 %v143
    %v463 = vunpack.c.h.b16 %v143
    %v464 = vunpack.c.l.b16 %v144
    %v465 = vunpack.c.h.b16 %v144
    %v466 = vunpack.c.l.b16 %v145
    %v467 = vunpack.c.h.b16 %v145
    %v468 = vunpack.c.l.b16 %v146
    %v469 = vunpack.c.h.b16 %v146
    %v470 = vunpack.c.l.b16 %v147
    %v471 = vunpack.c.h.b16 %v147
    %v472 = vunpack.c.l.b16 %v148
    %v473 = vunpack.c.h.b16 %v148
    %v474 = vunpack.c.l.b16 %v149
    %v475 = vunpack.c.h.b16 %v149
    %v476 = vunpack.c.l.b16 %v150
    %v477 = vunpack.c.h.b16 %v150
    %v478 = vunpack.c.l.b16 %v151
    %v479 = vunpack.c.h.b16 %v151
    %v480 = vunpack.c.l.b16 %v152
    %v481 = vunpack.c.h.b16 %v152
    %v482 = vunpack.c.l.b16 %v153
    %v483 = vunpack.c.h.b16 %v153
    %v484 = vunpack.c.l.b16 %v154
    %v485 = vunpack.c.h.b16 %v154
    %v486 = vunpack.c.l.b16 %v155
    %v487 = vunpack.c.h.b16 %v155
    %v488 = vunpack.c.l.b16 %v156
    %v489 = vunpack.c.h.b16 %v156
    %v490 = vunpack.c.l.b16 %v157
    %v491 = vunpack.c.h.b16 %v157
    %v492 = vunpack.c.l.b16 %v158
    %v493 = vunpack.c.h.b16 %v158
    %v494 = vunpack.c.l.b16 %v159
    %v495 = vunpack.c.h.b16 %v159
    %v496 = vunpack.c.l.b16 %v160
    %v497 = vunpack.c.h.b16 %v160
    %v498 = vpack.c.b16 %v310, %v306
    %v499 = vpack.c.b16 %v311, %v307
    %v500 = vpack.c.b16 %v312, %v308
    %v501 = vpack.c.b16 %v313, %v309
    %v502 = vpack.c.b16 %v318, %v314
    %v503 = vpack.c.b16 %v319, %v315
    %v504 = vpack.c.b16 %v320, %v316
    %v505 = vpack.c.b16 %v321, %v317
    %v506 = vpack.c.b16 %v326, %v322
    %v507 = vpack.c.b16 %v327, %v323
    %v508 = vpack.c.b16 %v328, %v324
    %v509 = vpack.c.b16 %v329, %v325
    %v510 = vpack.c.b16 %v334, %v330
    %v511 = vpack.c.b16 %v335, %v331
    %v512 = vpack.c.b16 %v336, %v332
    %v513 = vpack.c.b16 %v337, %v333
    %v514 = vpack.c.b16 %v342, %v338
    %v515 = vpack.c.b16 %v343, %v339
    %v516 = vpack.c.b16 %v344, %v340
    %v517 = vpack.c.b16 %v345, %v341
    %v518 = vpack.c.b16 %v350, %v346
    %v519 = vpack.c.b16 %v351, %v347
    %v520 = vpack.c.b16 %v352, %v348
    %v521 = vpack.c.b16 %v353, %v349
    %v522 = vpack.c.b16 %v358, %v354
    %v523 = vpack.c.b16 %v359, %v355
    %v524 = vpack.c.b16 %v360, %v356
    %v525 = vpack.c.b16 %v361, %v357
    %v526 = vpack.c.b16 %v366, %v362
    %v527 = vpack.c.b16 %v367, %v363
    %v528 = vpack.c.b16 %v368, %v364
    %v529 = vpack.c.b16 %v369, %v365
    %v530 = vpack.c.b16 %v374, %v370
    %v531 = vpack.c.b16 %v375, %v371
    %v532 = vpack.c.b16 %v376, %v372
    %v533 = vpack.c.b16 %v377, %v373
    %v534 = vpack.c.b16 %v382, %v378
    %v535 = vpack.c.b16 %v383, %v379
    %v536 = vpack.c.b16 %v384, %v380
    %v537 = vpack.c.b16 %v385, %v381
    %v538 = vpack.c.b16 %v390, %v386
    %v539 = vpack.c.b16 %v391, %v387
    %v540 = vpack.c.b16 %v392, %v388
    %v541 = vpack.c.b16 %v393, %v389
    %v542 = vpack.c.b16 %v398, %v394
    %v543 = vpack.c.b16 %v399, %v395
    %v544 = vpack.c.b16 %v400, %v396
    %v545 = vpack.c.b16 %v401, %v397
    %v546 = vpack.c.b16 %v406, %v402
    %v547 = vpack.c.b16 %v407, %v403
    %v548 = vpack.c.b16 %v408, %v404
    %v549 = vpack.c.b16 %v409, %v405
    %v550 = vpack.c.b16 %v414, %v410
    %v551 = vpack.c.b16 %v415, %v411
    %v552 = vpack.c.b16 %v416, %v412
    %v553 = vpack.c.b16 %v417, %v413
    %v554 = vpack.c.b16 %v422, %v418
    %v555 = vpack.c.b16 %v423, %v419
    %v556 = vpack.c.b16 %v424, %v420
    %v557 = vpack.c.b16 %v425, %v421
    %v558 = vpack.c.b16 %v430, %v426
    %v559 = vpack.c.b16 %v431, %v427
    %v560 = vpack.c.b16 %v432, %v428
    %v561 = vpack.c.b16 %v433, %v429
    %v562 = vpack.c.b16 %v438, %v434
    %v563 = vpack.c.b16 %v439, %v435
    %v564 = vpack.c.b16 %v440, %v436
    %v565 = vpack.c.b16 %v441, %v437
    %v566 = vpack.c.b16 %v446, %v442
    %v567 = vpack.c.b16 %v447, %v443
    %v568 = vpack.c.b16 %v448, %v444
    %v569 = vpack.c.b16 %v449, %v445
    %v570 = vpack.c.b16 %v454, %v450
    %v571 = vpack.c.b16 %v455, %v451
    %v572 = vpack.c.b16 %v456, %v452
    %v573 = vpack.c.b16 %v457, %v453
    %v574 = vpack.c.b16 %v462, %v458
    %v575 = vpack.c.b16 %v463, %v459
    %v576 = vpack.c.b16 %v464, %v460
    %v577 = vpack.c.b16 %v465, %v461
    %v578 = vpack.c.b16 %v470, %v466
    %v579 = vpack.c.b16 %v471, %v467
    %v580 = vpack.c.b16 %v472, %v468
    %v581 = vpack.c.b16 %v473, %v469
    %v582 = vpack.c.b16 %v478, %v474
    %v583 = vpack.c.b16 %v479, %v475
    %v584 = vpack.c.b16 %v480, %v476
    %v585 = vpack.c.b16 %v481, %v477
    %v586 = vpack.c.b16 %v486, %v482
    %v587 = vpack.c.b16 %v487, %v483
    %v588 = vpack.c.b16 %v488, %v484
    %v589 = vpack.c.b16 %v489, %v485
    %v590 = vpack.c.b16 %v494, %v490
    %v591 = vpack.c.b16 %v495, %v491
    %v592 = vpack.c.b16 %v496, %v492
    %v593 = vpack.c.b16 %v497, %v493
    %690 = vmatprep.subr.bf16.mxu0 %v499
    %691 = vmatpush1.bf16.msra.mxu0 %v498
    %692 = vmatprep.subr.bf16.mxu0 %v503
    %693 = vmatpush1.bf16.msra.mxu0 %v502
    %694 = vmatprep.subr.bf16.mxu0 %v507
    %695 = vmatpush1.bf16.msra.mxu0 %v506
    %696 = vmatprep.subr.bf16.mxu0 %v511
    %697 = vmatpush1.bf16.msra.mxu0 %v510
    %698 = vmatprep.subr.bf16.mxu0 %v515
    %699 = vmatpush1.bf16.msra.mxu0 %v514
    %700 = vmatprep.subr.bf16.mxu0 %v519
    %701 = vmatpush1.bf16.msra.mxu0 %v518
    %702 = vmatprep.subr.bf16.mxu0 %v523
    %703 = vmatpush1.bf16.msra.mxu0 %v522
    %704 = vmatprep.subr.bf16.mxu0 %v527
    %705 = vmatpush1.bf16.msra.mxu0 %v526
    %706 = vmatprep.subr.bf16.mxu0 %v531
    %707 = vmatpush1.bf16.msra.mxu0 %v530
    %708 = vmatprep.subr.bf16.mxu0 %v535
    %709 = vmatpush1.bf16.msra.mxu0 %v534
    %710 = vmatprep.subr.bf16.mxu0 %v539
    %711 = vmatpush1.bf16.msra.mxu0 %v538
    %712 = vmatprep.subr.bf16.mxu0 %v543
    %713 = vmatpush1.bf16.msra.mxu0 %v542
    %714 = vmatprep.subr.bf16.mxu0 %v547
    %715 = vmatpush1.bf16.msra.mxu0 %v546
    %716 = vmatprep.subr.bf16.mxu0 %v551
    %717 = vmatpush1.bf16.msra.mxu0 %v550
    %718 = vmatprep.subr.bf16.mxu0 %v555
    %719 = vmatpush1.bf16.msra.mxu0 %v554
    %720 = vmatprep.subr.bf16.mxu0 %v559
    %721 = vmatpush1.bf16.msra.mxu0 %v558
    %722 = vmatprep.mubr.bf16.mxu0 %v205
    %723 = vmatmul.mubr.bf16.gmra.mrb[0].mxu0 %v198
    %v724 = vpop.f32.mrb[0].mxu0
    %v725 = vadd.f32 %v166, %v724
    %v726 = vpop.f32.mrb[0].mxu0
    %v727 = vadd.f32 %v170, %v726
    %v728 = vpop.f32.mrb[0].mxu0
    %v729 = vpop.f32.mrb[0].mxu0
    %730 = vdwg.mxu0
    %731 = vmatprep.subr.bf16.mxu0 %v563
    %732 = vmatpush1.bf16.msra.mxu0 %v562
    %733 = vmatprep.subr.bf16.mxu0 %v567
    %734 = vmatpush1.bf16.msra.mxu0 %v566
    %735 = vmatprep.subr.bf16.mxu0 %v571
    %736 = vmatpush1.bf16.msra.mxu0 %v570
    %737 = vmatprep.subr.bf16.mxu0 %v575
    %738 = vmatpush1.bf16.msra.mxu0 %v574
    %739 = vmatprep.subr.bf16.mxu0 %v579
    %740 = vmatpush1.bf16.msra.mxu0 %v578
    %741 = vmatprep.subr.bf16.mxu0 %v583
    %742 = vmatpush1.bf16.msra.mxu0 %v582
    %743 = vmatprep.subr.bf16.mxu0 %v587
    %744 = vmatpush1.bf16.msra.mxu0 %v586
    %745 = vmatprep.subr.bf16.mxu0 %v591
    %746 = vmatpush1.bf16.msra.mxu0 %v590
    %747 = vmatprep.subr.bf16.mxu0 0
    %748 = vmatpush1.bf16.msra.mxu0 0
    %749 = vmatprep.subr.bf16.mxu0 0
    %750 = vmatpush1.bf16.msra.mxu0 0
    %751 = vmatprep.subr.bf16.mxu0 0
    %752 = vmatpush1.bf16.msra.mxu0 0
    %753 = vmatprep.subr.bf16.mxu0 0
    %754 = vmatpush1.bf16.msra.mxu0 0
    %755 = vmatprep.subr.bf16.mxu0 0
    %756 = vmatpush1.bf16.msra.mxu0 0
    %757 = vmatprep.subr.bf16.mxu0 0
    %758 = vmatpush1.bf16.msra.mxu0 0
    %759 = vmatprep.subr.bf16.mxu0 0
    %760 = vmatpush1.bf16.msra.mxu0 0
    %761 = vmatprep.subr.bf16.mxu0 0
    %762 = vmatpush1.bf16.msra.mxu0 0
    %763 = vmatprep.mubr.bf16.mxu0 0
    %764 = vmatmul.mubr.bf16.gmra.mrb[0].mxu0 %v206
    %v765 = vpop.f32.mrb[0].mxu0
    %v766 = vadd.f32 %v725, %v765
    %v767 = vpop.f32.mrb[0].mxu0
    %v768 = vadd.f32 %v727, %v767
    %v769 = vpop.f32.mrb[0].mxu0
    %v770 = vpop.f32.mrb[0].mxu0
    %771 = vdwg.mxu0
    %772 = vmatprep.subr.bf16.mxu0 %v501
    %773 = vmatpush1.bf16.msra.mxu0 %v500
    %774 = vmatprep.subr.bf16.mxu0 %v505
    %775 = vmatpush1.bf16.msra.mxu0 %v504
    %776 = vmatprep.subr.bf16.mxu0 %v509
    %777 = vmatpush1.bf16.msra.mxu0 %v508
    %778 = vmatprep.subr.bf16.mxu0 %v513
    %779 = vmatpush1.bf16.msra.mxu0 %v512
    %780 = vmatprep.subr.bf16.mxu0 %v517
    %781 = vmatpush1.bf16.msra.mxu0 %v516
    %782 = vmatprep.subr.bf16.mxu0 %v521
    %783 = vmatpush1.bf16.msra.mxu0 %v520
    %784 = vmatprep.subr.bf16.mxu0 %v525
    %785 = vmatpush1.bf16.msra.mxu0 %v524
    %786 = vmatprep.subr.bf16.mxu0 %v529
    %787 = vmatpush1.bf16.msra.mxu0 %v528
    %788 = vmatprep.subr.bf16.mxu0 %v533
    %789 = vmatpush1.bf16.msra.mxu0 %v532
    %790 = vmatprep.subr.bf16.mxu0 %v537
    %791 = vmatpush1.bf16.msra.mxu0 %v536
    %792 = vmatprep.subr.bf16.mxu0 %v541
    %793 = vmatpush1.bf16.msra.mxu0 %v540
    %794 = vmatprep.subr.bf16.mxu0 %v545
    %795 = vmatpush1.bf16.msra.mxu0 %v544
    %796 = vmatprep.subr.bf16.mxu0 %v549
    %797 = vmatpush1.bf16.msra.mxu0 %v548
    %798 = vmatprep.subr.bf16.mxu0 %v553
    %799 = vmatpush1.bf16.msra.mxu0 %v552
    %800 = vmatprep.subr.bf16.mxu0 %v557
    %801 = vmatpush1.bf16.msra.mxu0 %v556
    %802 = vmatprep.subr.bf16.mxu0 %v561
    %803 = vmatpush1.bf16.msra.mxu0 %v560
    %804 = vmatprep.mubr.bf16.mxu0 %v205
    %805 = vmatmul.mubr.bf16.gmra.mrb[0].mxu0 %v198
    %v806 = vpop.f32.mrb[0].mxu0
    %v807 = vadd.f32 %v174, %v806
    %v808 = vpop.f32.mrb[0].mxu0
    %v809 = vadd.f32 %v178, %v808
    %v810 = vpop.f32.mrb[0].mxu0
    %v811 = vpop.f32.mrb[0].mxu0
    %812 = vdwg.mxu0
    %813 = vmatprep.subr.bf16.mxu0 %v565
    %814 = vmatpush1.bf16.msra.mxu0 %v564
    %815 = vmatprep.subr.bf16.mxu0 %v569
    %816 = vmatpush1.bf16.msra.mxu0 %v568
    %817 = vmatprep.subr.bf16.mxu0 %v573
    %818 = vmatpush1.bf16.msra.mxu0 %v572
    %819 = vmatprep.subr.bf16.mxu0 %v577
    %820 = vmatpush1.bf16.msra.mxu0 %v576
    %821 = vmatprep.subr.bf16.mxu0 %v581
    %822 = vmatpush1.bf16.msra.mxu0 %v580
    %823 = vmatprep.subr.bf16.mxu0 %v585
    %824 = vmatpush1.bf16.msra.mxu0 %v584
    %825 = vmatprep.subr.bf16.mxu0 %v589
    %826 = vmatpush1.bf16.msra.mxu0 %v588
    %827 = vmatprep.subr.bf16.mxu0 %v593
    %828 = vmatpush1.bf16.msra.mxu0 %v592
    %829 = vmatprep.subr.bf16.mxu0 0
    %830 = vmatpush1.bf16.msra.mxu0 0
    %831 = vmatprep.subr.bf16.mxu0 0
    %832 = vmatpush1.bf16.msra.mxu0 0
    %833 = vmatprep.subr.bf16.mxu0 0
    %834 = vmatpush1.bf16.msra.mxu0 0
    %835 = vmatprep.subr.bf16.mxu0 0
    %836 = vmatpush1.bf16.msra.mxu0 0
    %837 = vmatprep.subr.bf16.mxu0 0
    %838 = vmatpush1.bf16.msra.mxu0 0
    %839 = vmatprep.subr.bf16.mxu0 0
    %840 = vmatpush1.bf16.msra.mxu0 0
    %841 = vmatprep.subr.bf16.mxu0 0
    %842 = vmatpush1.bf16.msra.mxu0 0
    %843 = vmatprep.subr.bf16.mxu0 0
    %844 = vmatpush1.bf16.msra.mxu0 0
    %845 = vmatprep.mubr.bf16.mxu0 0
    %846 = vmatmul.mubr.bf16.gmra.mrb[0].mxu0 %v206
    %v847 = vpop.f32.mrb[0].mxu0
    %v848 = vadd.f32 %v807, %v847
    %v849 = vpop.f32.mrb[0].mxu0
    %v850 = vadd.f32 %v809, %v849
    %v851 = vpop.f32.mrb[0].mxu0
    %v852 = vpop.f32.mrb[0].mxu0
    %853 = vdwg.mxu0
    %854 = vst [vmem:[#allocation8] sm:$0x3] %v850
    %vm855 = vcmp.gt.f32.partialorder %v766, 0.0
    %vm856 = vcmp.gt.f32.partialorder %v768, 0.0
    %vm857 = vcmp.gt.f32.partialorder %v848, 0.0
    %v858 = vmin.f32 %v766, 0.0
    %v859 = vmin.f32 %v768, 0.0
    %v860 = vmin.f32 %v848, 0.0
    %v861 = vmul.f32 %v858, 1.442695
    %v862 = vpow.pop %v861
    %v863 = vmul.f32 %v859, 1.442695
    %v864 = vpow.pop %v863
    %v865 = vmul.f32 %v860, 1.442695
    %v866 = vpow.pop %v865
    %v867 = vsub.f32 %v862, 1.0
    %v868 = vsub.f32 %v864, 1.0
    %v869 = vsub.f32 %v866, 1.0
    %v870 = vsel %vm855, %v766, %v867
    %v871 = vsel %vm856, %v768, %v868
    %v872 = vsel %vm857, %v848, %v869
    %v873 = vpack.c.bf16 %v870, %v870
    %v874 = vpack.c.bf16 %v871, %v871
    %v875 = vpack.c.bf16 %v872, %v872
    %v876 = vld [vmem:[#allocation7] sm:$0xf]
    %v877 = vld [vmem:[#allocation7 + $0x4] sm:$0xf]
    %v878 = vld [vmem:[#allocation7 + $0x8] sm:$0xf]
    %v879 = vld [vmem:[#allocation7 + $0xc] sm:$0xf]
    %v880 = vld [vmem:[#allocation7 + $0x10] sm:$0xf]
    %v881 = vld [vmem:[#allocation7 + $0x14] sm:$0xf]
    %v882 = vld [vmem:[#allocation7 + $0x18] sm:$0xf]
    %v883 = vld [vmem:[#allocation7 + $0x1c] sm:$0xf]
    %v884 = vld [vmem:[#allocation7 + $0x20] sm:$0xf]
    %v885 = vld [vmem:[#allocation7 + $0x24] sm:$0xf]
    %v886 = vld [vmem:[#allocation7 + $0x28] sm:$0xf]
    %v887 = vld [vmem:[#allocation7 + $0x2c] sm:$0xf]
    %v888 = vld [vmem:[#allocation7 + $0x30] sm:$0xf]
    %v889 = vld [vmem:[#allocation7 + $0x34] sm:$0xf]
    %v890 = vld [vmem:[#allocation7 + $0x38] sm:$0xf]
    %v891 = vld [vmem:[#allocation7 + $0x3c] sm:$0xf]
    %v892 = vld [vmem:[#allocation7 + $0x40] sm:$0xf]
    %v893 = vld [vmem:[#allocation7 + $0x44] sm:$0xf]
    %v894 = vld [vmem:[#allocation7 + $0x48] sm:$0xf]
    %v895 = vld [vmem:[#allocation7 + $0x4c] sm:$0xf]
    %v896 = vld [vmem:[#allocation7 + $0x50] sm:$0xf]
    %v897 = vld [vmem:[#allocation7 + $0x54] sm:$0xf]
    %v898 = vld [vmem:[#allocation7 + $0x58] sm:$0xf]
    %v899 = vld [vmem:[#allocation7 + $0x5c] sm:$0xf]
    %v900 = vld [vmem:[#allocation7 + $0x60] sm:$0xf]
    %v901 = vld [vmem:[#allocation7 + $0x64] sm:$0xf]
    %v902 = vld [vmem:[#allocation7 + $0x68] sm:$0xf]
    %v903 = vld [vmem:[#allocation7 + $0x6c] sm:$0xf]
    %v904 = vld [vmem:[#allocation7 + $0x70] sm:$0xf]
    %v905 = vld [vmem:[#allocation7 + $0x74] sm:$0xf]
    %v906 = vld [vmem:[#allocation7 + $0x78] sm:$0xf]
    %v907 = vld [vmem:[#allocation7 + $0x7c] sm:$0xf]
    %v908 = vld [vmem:[#allocation7 + $0x80] sm:$0xf]
    %v909 = vld [vmem:[#allocation7 + $0x84] sm:$0xf]
    %v910 = vld [vmem:[#allocation7 + $0x88] sm:$0xf]
    %v911 = vld [vmem:[#allocation7 + $0x8c] sm:$0xf]
    %v912 = vld [vmem:[#allocation7 + $0x90] sm:$0xf]
    %v913 = vld [vmem:[#allocation7 + $0x94] sm:$0xf]
    %v914 = vld [vmem:[#allocation7 + $0x98] sm:$0xf]
    %v915 = vld [vmem:[#allocation7 + $0x9c] sm:$0xf]
    %v916 = vld [vmem:[#allocation7 + $0xa0] sm:$0xf]
    %v917 = vld [vmem:[#allocation7 + $0xa4] sm:$0xf]
    %v918 = vld [vmem:[#allocation7 + $0xa8] sm:$0xf]
    %v919 = vld [vmem:[#allocation7 + $0xac] sm:$0xf]
    %v920 = vld [vmem:[#allocation7 + $0xb0] sm:$0xf]
    %v921 = vld [vmem:[#allocation7 + $0xb4] sm:$0xf]
    %v922 = vld [vmem:[#allocation7 + $0xb8] sm:$0xf]
    %v923 = vld [vmem:[#allocation7 + $0xbc] sm:$0xf]
    %v924 = vld [vmem:[%s4] sm:$0x1]
    %v926 = vlaneseq
    %v927 = vshrl.u32 %v926, 7
    %v928 = vsub.s32 0, %v927
    %v929 = vrot.slane %v924, %v928
    %v979 = vunpack.c.l.b16 %v876
    %v980 = vunpack.c.l.b16 %v877
    %v981 = vunpack.c.l.b16 %v878
    %v982 = vunpack.c.l.b16 %v879
    %v983 = vunpack.c.l.b16 %v880
    %v984 = vunpack.c.l.b16 %v881
    %v985 = vunpack.c.l.b16 %v882
    %v986 = vunpack.c.l.b16 %v883
    %v987 = vunpack.c.l.b16 %v884
    %v988 = vunpack.c.l.b16 %v885
    %v989 = vunpack.c.l.b16 %v886
    %v990 = vunpack.c.l.b16 %v887
    %v991 = vunpack.c.l.b16 %v888
    %v992 = vunpack.c.l.b16 %v889
    %v993 = vunpack.c.l.b16 %v890
    %v994 = vunpack.c.l.b16 %v891
    %v995 = vunpack.c.l.b16 %v892
    %v996 = vunpack.c.l.b16 %v893
    %v997 = vunpack.c.l.b16 %v894
    %v998 = vunpack.c.l.b16 %v895
    %v999 = vunpack.c.l.b16 %v896
    %v1000 = vunpack.c.l.b16 %v897
    %v1001 = vunpack.c.l.b16 %v898
    %v1002 = vunpack.c.l.b16 %v899
    %v1003 = vunpack.c.l.b16 %v900
    %v1004 = vunpack.c.l.b16 %v901
    %v1005 = vunpack.c.l.b16 %v902
    %v1006 = vunpack.c.l.b16 %v903
    %v1007 = vunpack.c.l.b16 %v904
    %v1008 = vunpack.c.l.b16 %v905
    %v1009 = vunpack.c.l.b16 %v906
    %v1010 = vunpack.c.l.b16 %v907
    %v1011 = vunpack.c.l.b16 %v908
    %v1012 = vunpack.c.l.b16 %v909
    %v1013 = vunpack.c.l.b16 %v910
    %v1014 = vunpack.c.l.b16 %v911
    %v1015 = vunpack.c.l.b16 %v912
    %v1016 = vunpack.c.l.b16 %v913
    %v1017 = vunpack.c.l.b16 %v914
    %v1018 = vunpack.c.l.b16 %v915
    %v1019 = vunpack.c.l.b16 %v916
    %v1020 = vunpack.c.l.b16 %v917
    %v1021 = vunpack.c.l.b16 %v918
    %v1022 = vunpack.c.l.b16 %v919
    %v1023 = vunpack.c.l.b16 %v920
    %v1024 = vunpack.c.l.b16 %v921
    %v1025 = vunpack.c.l.b16 %v922
    %v1026 = vunpack.c.l.b16 %v923
    %v1027 = vpack.c.b16 %v980, %v979
    %v1028 = vpack.c.b16 %v982, %v981
    %v1029 = vpack.c.b16 %v984, %v983
    %v1030 = vpack.c.b16 %v986, %v985
    %v1031 = vpack.c.b16 %v988, %v987
    %v1032 = vpack.c.b16 %v990, %v989
    %v1033 = vpack.c.b16 %v992, %v991
    %v1034 = vpack.c.b16 %v994, %v993
    %v1035 = vpack.c.b16 %v996, %v995
    %v1036 = vpack.c.b16 %v998, %v997
    %v1037 = vpack.c.b16 %v1000, %v999
    %v1038 = vpack.c.b16 %v1002, %v1001
    %v1039 = vpack.c.b16 %v1004, %v1003
    %v1040 = vpack.c.b16 %v1006, %v1005
    %v1041 = vpack.c.b16 %v1008, %v1007
    %v1042 = vpack.c.b16 %v1010, %v1009
    %v1043 = vpack.c.b16 %v1012, %v1011
    %v1044 = vpack.c.b16 %v1014, %v1013
    %v1045 = vpack.c.b16 %v1016, %v1015
    %v1046 = vpack.c.b16 %v1018, %v1017
    %v1047 = vpack.c.b16 %v1020, %v1019
    %v1048 = vpack.c.b16 %v1022, %v1021
    %v1049 = vpack.c.b16 %v1024, %v1023
    %v1050 = vpack.c.b16 %v1026, %v1025
    %1075 = vmatprep.subr.bf16.mxu0 0
    %1076 = vmatpush1.bf16.msra.mxu0 %v1027
    %1077 = vmatprep.subr.bf16.mxu0 0
    %1078 = vmatpush1.bf16.msra.mxu0 %v1028
    %1079 = vmatprep.subr.bf16.mxu0 0
    %1080 = vmatpush1.bf16.msra.mxu0 %v1029
    %1081 = vmatprep.subr.bf16.mxu0 0
    %1082 = vmatpush1.bf16.msra.mxu0 %v1030
    %1083 = vmatprep.subr.bf16.mxu0 0
    %1084 = vmatpush1.bf16.msra.mxu0 %v1031
    %1085 = vmatprep.subr.bf16.mxu0 0
    %1086 = vmatpush1.bf16.msra.mxu0 %v1032
    %1087 = vmatprep.subr.bf16.mxu0 0
    %1088 = vmatpush1.bf16.msra.mxu0 %v1033
    %1089 = vmatprep.subr.bf16.mxu0 0
    %1090 = vmatpush1.bf16.msra.mxu0 %v1034
    %1091 = vmatprep.subr.bf16.mxu0 0
    %1092 = vmatpush1.bf16.msra.mxu0 %v1035
    %1093 = vmatprep.subr.bf16.mxu0 0
    %1094 = vmatpush1.bf16.msra.mxu0 %v1036
    %1095 = vmatprep.subr.bf16.mxu0 0
    %1096 = vmatpush1.bf16.msra.mxu0 %v1037
    %1097 = vmatprep.subr.bf16.mxu0 0
    %1098 = vmatpush1.bf16.msra.mxu0 %v1038
    %1099 = vmatprep.subr.bf16.mxu0 0
    %1100 = vmatpush1.bf16.msra.mxu0 %v1039
    %1101 = vmatprep.subr.bf16.mxu0 0
    %1102 = vmatpush1.bf16.msra.mxu0 %v1040
    %1103 = vmatprep.subr.bf16.mxu0 0
    %1104 = vmatpush1.bf16.msra.mxu0 %v1041
    %1105 = vmatprep.subr.bf16.mxu0 0
    %1106 = vmatpush1.bf16.msra.mxu0 %v1042
    %1107 = vmatprep.mubr.bf16.mxu0 %v874
    %1108 = vmatmul.mubr.bf16.gmra.mrb[0].mxu0 %v873
    %v1109 = vpop.f32.mrb[0].mxu0
    %v1110 = vadd.f32 %v929, %v1109
    %v1111 = vpop.f32.mrb[0].mxu0
    %v1112 = vpop.f32.mrb[0].mxu0
    %v1113 = vpop.f32.mrb[0].mxu0
    %1114 = vdwg.mxu0
    %1115 = vmatprep.subr.bf16.mxu0 0
    %1116 = vmatpush1.bf16.msra.mxu0 %v1043
    %1117 = vmatprep.subr.bf16.mxu0 0
    %1118 = vmatpush1.bf16.msra.mxu0 %v1044
    %1119 = vmatprep.subr.bf16.mxu0 0
    %1120 = vmatpush1.bf16.msra.mxu0 %v1045
    %1121 = vmatprep.subr.bf16.mxu0 0
    %1122 = vmatpush1.bf16.msra.mxu0 %v1046
    %1123 = vmatprep.subr.bf16.mxu0 0
    %1124 = vmatpush1.bf16.msra.mxu0 %v1047
    %1125 = vmatprep.subr.bf16.mxu0 0
    %1126 = vmatpush1.bf16.msra.mxu0 %v1048
    %1127 = vmatprep.subr.bf16.mxu0 0
    %1128 = vmatpush1.bf16.msra.mxu0 %v1049
    %1129 = vmatprep.subr.bf16.mxu0 0
    %1130 = vmatpush1.bf16.msra.mxu0 %v1050
    %1131 = vmatprep.subr.bf16.mxu0 0
    %1132 = vmatpush1.bf16.msra.mxu0 0
    %1133 = vmatprep.subr.bf16.mxu0 0
    %1134 = vmatpush1.bf16.msra.mxu0 0
    %1135 = vmatprep.subr.bf16.mxu0 0
    %1136 = vmatpush1.bf16.msra.mxu0 0
    %1137 = vmatprep.subr.bf16.mxu0 0
    %1138 = vmatpush1.bf16.msra.mxu0 0
    %1139 = vmatprep.subr.bf16.mxu0 0
    %1140 = vmatpush1.bf16.msra.mxu0 0
    %1141 = vmatprep.subr.bf16.mxu0 0
    %1142 = vmatpush1.bf16.msra.mxu0 0
    %1143 = vmatprep.subr.bf16.mxu0 0
    %1144 = vmatpush1.bf16.msra.mxu0 0
    %1145 = vmatprep.subr.bf16.mxu0 0
    %1146 = vmatpush1.bf16.msra.mxu0 0
    %1147 = vmatprep.mubr.bf16.mxu0 0
    %1148 = vmatmul.mubr.bf16.gmra.mrb[0].mxu0 %v875
    %v1149 = vpop.f32.mrb[0].mxu0
    %v1150 = vadd.f32 %v1110, %v1149
    %v1151 = vpop.f32.mrb[0].mxu0
    %v1152 = vpop.f32.mrb[0].mxu0
    %v1153 = vpop.f32.mrb[0].mxu0
    %1154 = vdwg.mxu0
    %v1155 = vmul.f32 %v1150, %v1150
    %vm1156 = vcmask 1041408
    %v1157 = vsel %vm1156, %v1155, 0.0
    %1158 = vadd.xlane.f32.xlu0 %v1157
    %v1159 = vpop.xlane.xlu0 %1158
    %v1160 = vmax.f32 %v1159, 1e-24
    %v1161 = vrsqrt.pop %v1160
    %v1162 = vmul.f32 %v1150, %v1161
    %1163 = vst [vmem:[#allocation9] sm:$0x3] %v1162
    // Predicated region
    $region34: #{tpu_custom_call.1} parent=1 // pred_check
      _
    $region35: #{tpu_custom_call.1} parent=1 // pred_check_branch
      %1165 = sbr.rel (0) target = $region37
    $region36: #{tpu_custom_call.1} parent=1 // pred_region
      %s1167 = ssub.s32 32, 32
      %1168 = vsyncadd [#allocation4], %s1167
      %s1170 = sshll.u32 [#allocation8], 4
      %s1171 = int_to_ptr.vmem [resolvable:$true] %s1170
      %1173 = dma.vmem_to_hbm [thread:$0]  %s1171, 32, %s5, [#allocation4]
    $region37: #{tpu_custom_call.1} parent=1 // pred_fallthru
      _
    // Predicated region
    $region38: #{tpu_custom_call.1} parent=1 // pred_check
      _
    $region39: #{tpu_custom_call.1} parent=1 // pred_check_branch
      %1175 = sbr.rel (0) target = $region41
    $region40: #{tpu_custom_call.1} parent=1 // pred_region
      %s1177 = ssub.s32 32, 32
      %1178 = vsyncadd [#allocation10], %s1177
      %s1180 = sshll.u32 [#allocation9], 4
      %s1181 = int_to_ptr.vmem [resolvable:$true] %s1180
      %1183 = dma.vmem_to_hbm [thread:$0]  %s1181, 32, %s6, [#allocation10]
    $region41: #{tpu_custom_call.1} parent=1 // pred_fallthru
      _
    // Predicated region
    $region42: #{tpu_custom_call.1} parent=1 // pred_check
      _
    $region43: #{tpu_custom_call.1} parent=1 // pred_check_branch
      %1185 = sbr.rel (0) target = $region45
    $region44: #{tpu_custom_call.1} parent=1 // pred_region
      %1186 = dma.done [#allocation4], 32
    $region45: #{tpu_custom_call.1} parent=1 // pred_fallthru
      _
    // Predicated region
    $region46: #{tpu_custom_call.1} parent=1 // pred_check
      _
    $region47: #{tpu_custom_call.1} parent=1 // pred_check_branch
      %1188 = sbr.rel (0) target = $region49
    $region48: #{tpu_custom_call.1} parent=1 // pred_region
      %1189 = dma.done [#allocation10], 32
    $region49: #{tpu_custom_call.1} parent=1 // pred_fallthru
      _
    %1190 = vsyncpa [#allocation3], 1
    %1191 = vsyncpa [#allocation6], 1
    %1192 = vsyncpa [#allocation4], 1
    %1193 = vsyncpa [#allocation10], 1

</llo_original>
